<compile_context>
chip_gen: v7x
topology: tpu7x:2x2x1
jax: 0.10.0
libtpu: 0.0.40
codegen_flags: <defaults>
</compile_context>

<pallas_src>
import functools

import jax
import jax.numpy as jnp
import numpy as np
from jax import lax
from jax.experimental import pallas as pl
from jax.experimental.pallas import tpu as pltpu


def _pair(v):
    if isinstance(v, (tuple, list)):
        assert len(v) == 2
        return int(v[0]), int(v[1])
    return int(v), int(v)


def _round_up(x, m):
    return ((x + m - 1) // m) * m


# ---------------------------------------------------------------------------
# Pallas kernel: one (batch, output-row-tile) grid cell of
#     y = LeakyReLU( conv2d(x, w; stride, padding, dilation) + b )
# computed as an accumulation of KH*KW shifted (M, Cin)@(Cin, Cout) matmuls
# over the stride-phase-decomposed input resident in VMEM.
# ---------------------------------------------------------------------------
def _down_block_kernel(x_ref, w_ref, b_ref, o_ref, *, taps, negative_slope):
    # x_ref: (SH*SW, PH, PW, Cin_pad)   stride-phases of the current batch item
    # w_ref: (KH*KW, Cin_pad, Cout_pad) per-tap weight slabs (bf16)
    # b_ref: (1, Cout_pad)              f32 bias
    # o_ref: (1, TOH, OW, Cout_pad)     f32 output row tile (lane-dense)
    _, toh, ow, cout = o_ref.shape
    cin = x_ref.shape[-1]

    r = pl.program_id(1)
    row0 = pl.multiple_of(r * toh, toh)

    acc = jnp.zeros((toh * ow, cout), jnp.float32)
    for t, (pidx, qh, qw) in enumerate(taps):
        xs = x_ref[pidx, pl.ds(row0 + qh, toh), pl.ds(qw, ow), :]
        acc = acc + jnp.dot(
            xs.reshape(toh * ow, cin),
            w_ref[t],
            preferred_element_type=jnp.float32,
        )
    acc = acc + b_ref[...]
    acc = jnp.where(acc >= 0.0, acc, negative_slope * acc)
    o_ref[0] = acc.reshape(toh, ow, cout).astype(o_ref.dtype)


# ---------------------------------------------------------------------------
# Wrapper: NCHW in / NCHW out, PyTorch Conv2d weight layout (Cout, Cin, KH, KW).
# ---------------------------------------------------------------------------
def down_block(x_nchw, w, b, *, stride=2, padding=1, dilation=1,
               negative_slope=0.2, block_rows=None, compute_dtype=jnp.bfloat16):
    N, Cin, H, W = x_nchw.shape
    Cout, Cin_w, KH, KW = w.shape
    assert Cin_w == Cin
    sh, sw = _pair(stride)
    ph_, pw_ = _pair(padding)
    dh, dw = _pair(dilation)

    OH = (H + 2 * ph_ - dh * (KH - 1) - 1) // sh + 1
    OW = (W + 2 * pw_ - dw * (KW - 1) - 1) // sw + 1
    assert OH > 0 and OW > 0

    # Channel padding: contraction dim to a multiple of 8, output channels to a
    # multiple of 128 (lane-dense stores; padded columns sliced off below).
    Cin_pad = max(8, _round_up(Cin, 8))
    Cout_pad = _round_up(Cout, 128)

    if block_rows is None:
        block_rows = max(1, min(OH, 4096 // max(OW, 1)))
    block_rows = min(block_rows, OH)
    OHp = _round_up(OH, block_rows)
    n_row_tiles = OHp // block_rows

    # Tap table: kernel offset (kh, kw) -> (flat stride-phase index, in-phase shift).
    max_qh = (dh * (KH - 1)) // sh
    max_qw = (dw * (KW - 1)) // sw
    taps = []
    for kh in range(KH):
        for kw in range(KW):
            ph = (dh * kh) % sh
            pw = (dw * kw) % sw
            taps.append((ph * sw + pw, (dh * kh) // sh, (dw * kw) // sw))
    taps = tuple(taps)

    # Stride-phase decomposition of the zero-padded input (amplification = 1x,
    # unit-stride accesses inside the kernel).
    PH = max(-(-(H + 2 * ph_) // sh), OHp + max_qh)
    PW = max(-(-(W + 2 * pw_) // sw), OW + max_qw)
    x_nhwc = jnp.transpose(x_nchw, (0, 2, 3, 1)).astype(compute_dtype)
    x_full = jnp.zeros((N, PH * sh, PW * sw, Cin_pad), compute_dtype)
    x_full = x_full.at[:, ph_:ph_ + H, pw_:pw_ + W, :Cin].set(x_nhwc)
    phases = (x_full.reshape(N, PH, sh, PW, sw, Cin_pad)
                    .transpose(0, 2, 4, 1, 3, 5)
                    .reshape(N * sh * sw, PH, PW, Cin_pad))

    # Per-tap weight slabs (KH*KW, Cin_pad, Cout_pad), tap order == `taps` order.
    w_taps = jnp.transpose(w, (2, 3, 1, 0)).reshape(KH * KW, Cin, Cout)
    w_taps = (jnp.zeros((KH * KW, Cin_pad, Cout_pad), compute_dtype)
                 .at[:, :Cin, :Cout].set(w_taps.astype(compute_dtype)))
    b_pad = (jnp.zeros((1, Cout_pad), jnp.float32)
                .at[0, :Cout].set(b.astype(jnp.float32)))

    kernel = functools.partial(_down_block_kernel, taps=taps,
                               negative_slope=negative_slope)

    grid = (N, n_row_tiles)
    in_specs = [
        pl.BlockSpec((sh * sw, PH, PW, Cin_pad), lambda n, r: (n, 0, 0, 0)),
        pl.BlockSpec((KH * KW, Cin_pad, Cout_pad), lambda n, r: (0, 0, 0)),
        pl.BlockSpec((1, Cout_pad), lambda n, r: (0, 0)),
    ]
    out_spec = pl.BlockSpec((1, block_rows, OW, Cout_pad),
                            lambda n, r: (n, r, 0, 0))

    itemsize = jnp.dtype(compute_dtype).itemsize
    block_bytes = (sh * sw * PH * PW * Cin_pad * itemsize
                   + KH * KW * Cin_pad * Cout_pad * itemsize
                   + Cout_pad * 4
                   + block_rows * OW * Cout_pad * 4)
    vmem_limit = int(min(max(6 * block_bytes, 32 * 1024 * 1024), 48 * 1024 * 1024))

    y = pl.pallas_call(
        kernel,
        out_shape=jax.ShapeDtypeStruct((N, OHp, OW, Cout_pad), jnp.float32),
        grid=grid,
        in_specs=in_specs,
        out_specs=out_spec,
        compiler_params=pltpu.CompilerParams(
            dimension_semantics=("parallel", "arbitrary"),
            vmem_limit_bytes=vmem_limit),
    )(phases, w_taps, b_pad)

    y = y[:, :OH, :, :Cout]
    return jnp.transpose(y, (0, 3, 1, 2))  # NHWC -> NCHW


# Pure-XLA reference (same bf16 inputs, f32 accumulation) for correctness.
def _ref_down_block(x_nchw, w, b, *, stride=2, padding=1, dilation=1,
                    negative_slope=0.2, compute_dtype=jnp.bfloat16):
    sh, sw = _pair(stride)
    ph_, pw_ = _pair(padding)
    dh, dw = _pair(dilation)
    y = lax.conv_general_dilated(
        x_nchw.astype(compute_dtype), w.astype(compute_dtype),
        window_strides=(sh, sw), padding=[(ph_, ph_), (pw_, pw_)],
        rhs_dilation=(dh, dw),
        dimension_numbers=("NCHW", "OIHW", "NCHW"),
        preferred_element_type=jnp.float32)
    y = y + b.reshape(1, -1, 1, 1).astype(jnp.float32)
    return jnp.where(y >= 0.0, y, negative_slope * y)


if __name__ == "__main__":
    key = jax.random.PRNGKey(0)
    k_x, k_w, k_b = jax.random.split(key, 3)

    # Small shapes consistent with DownBlock defaults: kernel 3x3, stride 2, pad 1.
    N, Cin, H, W = 2, 4, 16, 16
    Cout, KH, KW = 16, 3, 3
    stride, padding, dilation = 2, 1, 1

    x = jax.random.normal(k_x, (N, Cin, H, W), jnp.float32)
    bound = 1.0 / float(np.sqrt(Cin * KH * KW))   # PyTorch-default-style init
    w = jax.random.uniform(k_w, (Cout, Cin, KH, KW), jnp.float32, -bound, bound)
    b = jax.random.uniform(k_b, (Cout,), jnp.float32, -bound, bound)

    fwd = jax.jit(functools.partial(down_block, stride=stride, padding=padding,
                                    dilation=dilation, block_rows=4))
    out = jax.block_until_ready(fwd(x, w, b))

    OH = (H + 2 * padding - KH) // stride + 1
    OW = (W + 2 * padding - KW) // stride + 1
    assert out.shape == (N, Cout, OH, OW), out.shape

    ref = jax.block_until_ready(
        _ref_down_block(x, w, b, stride=stride, padding=padding, dilation=dilation))
    np.testing.assert_allclose(np.asarray(out), np.asarray(ref),
                               rtol=1e-3, atol=1e-3)

    print("KERNEL_OK")
</pallas_src>

<mosaic_0001>
module attributes {stable_mosaic.version = 11 : i64} {
  func.func @_down_block_kernel(%arg0: i32, %arg1: i32, %arg2: memref<4x9x9x8xbf16, #tpu.memory_space<vmem>>, %arg3: memref<9x8x128xbf16, #tpu.memory_space<vmem>>, %arg4: memref<1x128xf32, #tpu.memory_space<vmem>>, %arg5: memref<1x4x8x128xf32, #tpu.memory_space<vmem>>) attributes {dimension_semantics = [#tpu.dimension_semantics<parallel>, #tpu.dimension_semantics<arbitrary>], iteration_bounds = array<i64: 2, 2>, scalar_prefetch = 0 : i64, scratch_operands = 0 : i64, tpu.core_type = #tpu.core_type<tc>, window_params = [{transform_indices = @transform_0, window_bounds = array<i64: 4, 9, 9, 8>}, {pipeline_mode = #tpu.pipeline_mode<synchronous>, transform_indices = @transform_1, window_bounds = array<i64: 9, 8, 128>}, {pipeline_mode = #tpu.pipeline_mode<synchronous>, transform_indices = @transform_2, window_bounds = array<i64: 1, 128>}, {transform_indices = @transform_3, window_bounds = array<i64: 1, 4, 8, 128>}]} {
    %c4_i32 = arith.constant 4 : i32
    %0 = arith.muli %arg1, %c4_i32 : i32
    %1 = tpu.assume_multiple %0, 4 : i32
    %cst = arith.constant 0.000000e+00 : f32
    %2 = vector.broadcast %cst : f32 to vector<32x128xf32>
    %c0_i32 = arith.constant 0 : i32
    %3 = arith.addi %1, %c0_i32 : i32
    %c0 = arith.constant 0 : index
    %4 = arith.index_cast %3 : i32 to index
    %c0_0 = arith.constant 0 : index
    %c0_1 = arith.constant 0 : index
    %5 = vector.load %arg2[%c0, %4, %c0_0, %c0_1] : memref<4x9x9x8xbf16, #tpu.memory_space<vmem>>, vector<1x4x8x8xbf16>
    %6 = vector.shape_cast %5 : vector<1x4x8x8xbf16> to vector<4x8x8xbf16>
    %7 = vector.shape_cast %6 : vector<4x8x8xbf16> to vector<32x8xbf16>
    %c0_2 = arith.constant 0 : index
    %c0_3 = arith.constant 0 : index
    %c0_4 = arith.constant 0 : index
    %8 = vector.load %arg3[%c0_2, %c0_3, %c0_4] : memref<9x8x128xbf16, #tpu.memory_space<vmem>>, vector<1x8x128xbf16>
    %9 = vector.shape_cast %8 : vector<1x8x128xbf16> to vector<8x128xbf16>
    %cst_5 = arith.constant dense<0.000000e+00> : vector<32x128xf32>
    %10 = tpu.matmul %7, %9, %cst_5 {dimension_numbers = #tpu.dot_dimension_numbers<[1], [0], [0], [1], [0, 0, 1, 1], [], []>} : vector<32x8xbf16>, vector<8x128xbf16>, vector<32x128xf32> -> vector<32x128xf32>
    %11 = arith.addf %2, %10 : vector<32x128xf32>
    %c0_i32_6 = arith.constant 0 : i32
    %12 = arith.addi %1, %c0_i32_6 : i32
    %c1 = arith.constant 1 : index
    %13 = arith.index_cast %12 : i32 to index
    %c0_7 = arith.constant 0 : index
    %c0_8 = arith.constant 0 : index
    %14 = vector.load %arg2[%c1, %13, %c0_7, %c0_8] : memref<4x9x9x8xbf16, #tpu.memory_space<vmem>>, vector<1x4x8x8xbf16>
    %15 = vector.shape_cast %14 : vector<1x4x8x8xbf16> to vector<4x8x8xbf16>
    %16 = vector.shape_cast %15 : vector<4x8x8xbf16> to vector<32x8xbf16>
    %c1_9 = arith.constant 1 : index
    %c0_10 = arith.constant 0 : index
    %c0_11 = arith.constant 0 : index
    %17 = vector.load %arg3[%c1_9, %c0_10, %c0_11] : memref<9x8x128xbf16, #tpu.memory_space<vmem>>, vector<1x8x128xbf16>
    %18 = vector.shape_cast %17 : vector<1x8x128xbf16> to vector<8x128xbf16>
    %cst_12 = arith.constant dense<0.000000e+00> : vector<32x128xf32>
    %19 = tpu.matmul %16, %18, %cst_12 {dimension_numbers = #tpu.dot_dimension_numbers<[1], [0], [0], [1], [0, 0, 1, 1], [], []>} : vector<32x8xbf16>, vector<8x128xbf16>, vector<32x128xf32> -> vector<32x128xf32>
    %20 = arith.addf %11, %19 : vector<32x128xf32>
    %c0_i32_13 = arith.constant 0 : i32
    %21 = arith.addi %1, %c0_i32_13 : i32
    %c0_14 = arith.constant 0 : index
    %22 = arith.index_cast %21 : i32 to index
    %c1_15 = arith.constant 1 : index
    %c0_16 = arith.constant 0 : index
    %23 = vector.load %arg2[%c0_14, %22, %c1_15, %c0_16] : memref<4x9x9x8xbf16, #tpu.memory_space<vmem>>, vector<1x4x8x8xbf16>
    %24 = vector.shape_cast %23 : vector<1x4x8x8xbf16> to vector<4x8x8xbf16>
    %25 = vector.shape_cast %24 : vector<4x8x8xbf16> to vector<32x8xbf16>
    %c2 = arith.constant 2 : index
    %c0_17 = arith.constant 0 : index
    %c0_18 = arith.constant 0 : index
    %26 = vector.load %arg3[%c2, %c0_17, %c0_18] : memref<9x8x128xbf16, #tpu.memory_space<vmem>>, vector<1x8x128xbf16>
    %27 = vector.shape_cast %26 : vector<1x8x128xbf16> to vector<8x128xbf16>
    %cst_19 = arith.constant dense<0.000000e+00> : vector<32x128xf32>
    %28 = tpu.matmul %25, %27, %cst_19 {dimension_numbers = #tpu.dot_dimension_numbers<[1], [0], [0], [1], [0, 0, 1, 1], [], []>} : vector<32x8xbf16>, vector<8x128xbf16>, vector<32x128xf32> -> vector<32x128xf32>
    %29 = arith.addf %20, %28 : vector<32x128xf32>
    %c0_i32_20 = arith.constant 0 : i32
    %30 = arith.addi %1, %c0_i32_20 : i32
    %c2_21 = arith.constant 2 : index
    %31 = arith.index_cast %30 : i32 to index
    %c0_22 = arith.constant 0 : index
    %c0_23 = arith.constant 0 : index
    %32 = vector.load %arg2[%c2_21, %31, %c0_22, %c0_23] : memref<4x9x9x8xbf16, #tpu.memory_space<vmem>>, vector<1x4x8x8xbf16>
    %33 = vector.shape_cast %32 : vector<1x4x8x8xbf16> to vector<4x8x8xbf16>
    %34 = vector.shape_cast %33 : vector<4x8x8xbf16> to vector<32x8xbf16>
    %c3 = arith.constant 3 : index
    %c0_24 = arith.constant 0 : index
    %c0_25 = arith.constant 0 : index
    %35 = vector.load %arg3[%c3, %c0_24, %c0_25] : memref<9x8x128xbf16, #tpu.memory_space<vmem>>, vector<1x8x128xbf16>
    %36 = vector.shape_cast %35 : vector<1x8x128xbf16> to vector<8x128xbf16>
    %cst_26 = arith.constant dense<0.000000e+00> : vector<32x128xf32>
    %37 = tpu.matmul %34, %36, %cst_26 {dimension_numbers = #tpu.dot_dimension_numbers<[1], [0], [0], [1], [0, 0, 1, 1], [], []>} : vector<32x8xbf16>, vector<8x128xbf16>, vector<32x128xf32> -> vector<32x128xf32>
    %38 = arith.addf %29, %37 : vector<32x128xf32>
    %c0_i32_27 = arith.constant 0 : i32
    %39 = arith.addi %1, %c0_i32_27 : i32
    %c3_28 = arith.constant 3 : index
    %40 = arith.index_cast %39 : i32 to index
    %c0_29 = arith.constant 0 : index
    %c0_30 = arith.constant 0 : index
    %41 = vector.load %arg2[%c3_28, %40, %c0_29, %c0_30] : memref<4x9x9x8xbf16, #tpu.memory_space<vmem>>, vector<1x4x8x8xbf16>
    %42 = vector.shape_cast %41 : vector<1x4x8x8xbf16> to vector<4x8x8xbf16>
    %43 = vector.shape_cast %42 : vector<4x8x8xbf16> to vector<32x8xbf16>
    %c4 = arith.constant 4 : index
    %c0_31 = arith.constant 0 : index
    %c0_32 = arith.constant 0 : index
    %44 = vector.load %arg3[%c4, %c0_31, %c0_32] : memref<9x8x128xbf16, #tpu.memory_space<vmem>>, vector<1x8x128xbf16>
    %45 = vector.shape_cast %44 : vector<1x8x128xbf16> to vector<8x128xbf16>
    %cst_33 = arith.constant dense<0.000000e+00> : vector<32x128xf32>
    %46 = tpu.matmul %43, %45, %cst_33 {dimension_numbers = #tpu.dot_dimension_numbers<[1], [0], [0], [1], [0, 0, 1, 1], [], []>} : vector<32x8xbf16>, vector<8x128xbf16>, vector<32x128xf32> -> vector<32x128xf32>
    %47 = arith.addf %38, %46 : vector<32x128xf32>
    %c0_i32_34 = arith.constant 0 : i32
    %48 = arith.addi %1, %c0_i32_34 : i32
    %c2_35 = arith.constant 2 : index
    %49 = arith.index_cast %48 : i32 to index
    %c1_36 = arith.constant 1 : index
    %c0_37 = arith.constant 0 : index
    %50 = vector.load %arg2[%c2_35, %49, %c1_36, %c0_37] : memref<4x9x9x8xbf16, #tpu.memory_space<vmem>>, vector<1x4x8x8xbf16>
    %51 = vector.shape_cast %50 : vector<1x4x8x8xbf16> to vector<4x8x8xbf16>
    %52 = vector.shape_cast %51 : vector<4x8x8xbf16> to vector<32x8xbf16>
    %c5 = arith.constant 5 : index
    %c0_38 = arith.constant 0 : index
    %c0_39 = arith.constant 0 : index
    %53 = vector.load %arg3[%c5, %c0_38, %c0_39] : memref<9x8x128xbf16, #tpu.memory_space<vmem>>, vector<1x8x128xbf16>
    %54 = vector.shape_cast %53 : vector<1x8x128xbf16> to vector<8x128xbf16>
    %cst_40 = arith.constant dense<0.000000e+00> : vector<32x128xf32>
    %55 = tpu.matmul %52, %54, %cst_40 {dimension_numbers = #tpu.dot_dimension_numbers<[1], [0], [0], [1], [0, 0, 1, 1], [], []>} : vector<32x8xbf16>, vector<8x128xbf16>, vector<32x128xf32> -> vector<32x128xf32>
    %56 = arith.addf %47, %55 : vector<32x128xf32>
    %c1_i32 = arith.constant 1 : i32
    %57 = arith.addi %1, %c1_i32 : i32
    %c0_41 = arith.constant 0 : index
    %58 = arith.index_cast %57 : i32 to index
    %c0_42 = arith.constant 0 : index
    %c0_43 = arith.constant 0 : index
    %59 = vector.load %arg2[%c0_41, %58, %c0_42, %c0_43] : memref<4x9x9x8xbf16, #tpu.memory_space<vmem>>, vector<1x4x8x8xbf16>
    %60 = vector.shape_cast %59 : vector<1x4x8x8xbf16> to vector<4x8x8xbf16>
    %61 = vector.shape_cast %60 : vector<4x8x8xbf16> to vector<32x8xbf16>
    %c6 = arith.constant 6 : index
    %c0_44 = arith.constant 0 : index
    %c0_45 = arith.constant 0 : index
    %62 = vector.load %arg3[%c6, %c0_44, %c0_45] : memref<9x8x128xbf16, #tpu.memory_space<vmem>>, vector<1x8x128xbf16>
    %63 = vector.shape_cast %62 : vector<1x8x128xbf16> to vector<8x128xbf16>
    %cst_46 = arith.constant dense<0.000000e+00> : vector<32x128xf32>
    %64 = tpu.matmul %61, %63, %cst_46 {dimension_numbers = #tpu.dot_dimension_numbers<[1], [0], [0], [1], [0, 0, 1, 1], [], []>} : vector<32x8xbf16>, vector<8x128xbf16>, vector<32x128xf32> -> vector<32x128xf32>
    %65 = arith.addf %56, %64 : vector<32x128xf32>
    %c1_i32_47 = arith.constant 1 : i32
    %66 = arith.addi %1, %c1_i32_47 : i32
    %c1_48 = arith.constant 1 : index
    %67 = arith.index_cast %66 : i32 to index
    %c0_49 = arith.constant 0 : index
    %c0_50 = arith.constant 0 : index
    %68 = vector.load %arg2[%c1_48, %67, %c0_49, %c0_50] : memref<4x9x9x8xbf16, #tpu.memory_space<vmem>>, vector<1x4x8x8xbf16>
    %69 = vector.shape_cast %68 : vector<1x4x8x8xbf16> to vector<4x8x8xbf16>
    %70 = vector.shape_cast %69 : vector<4x8x8xbf16> to vector<32x8xbf16>
    %c7 = arith.constant 7 : index
    %c0_51 = arith.constant 0 : index
    %c0_52 = arith.constant 0 : index
    %71 = vector.load %arg3[%c7, %c0_51, %c0_52] : memref<9x8x128xbf16, #tpu.memory_space<vmem>>, vector<1x8x128xbf16>
    %72 = vector.shape_cast %71 : vector<1x8x128xbf16> to vector<8x128xbf16>
    %cst_53 = arith.constant dense<0.000000e+00> : vector<32x128xf32>
    %73 = tpu.matmul %70, %72, %cst_53 {dimension_numbers = #tpu.dot_dimension_numbers<[1], [0], [0], [1], [0, 0, 1, 1], [], []>} : vector<32x8xbf16>, vector<8x128xbf16>, vector<32x128xf32> -> vector<32x128xf32>
    %74 = arith.addf %65, %73 : vector<32x128xf32>
    %c1_i32_54 = arith.constant 1 : i32
    %75 = arith.addi %1, %c1_i32_54 : i32
    %c0_55 = arith.constant 0 : index
    %76 = arith.index_cast %75 : i32 to index
    %c1_56 = arith.constant 1 : index
    %c0_57 = arith.constant 0 : index
    %77 = vector.load %arg2[%c0_55, %76, %c1_56, %c0_57] : memref<4x9x9x8xbf16, #tpu.memory_space<vmem>>, vector<1x4x8x8xbf16>
    %78 = vector.shape_cast %77 : vector<1x4x8x8xbf16> to vector<4x8x8xbf16>
    %79 = vector.shape_cast %78 : vector<4x8x8xbf16> to vector<32x8xbf16>
    %c8 = arith.constant 8 : index
    %c0_58 = arith.constant 0 : index
    %c0_59 = arith.constant 0 : index
    %80 = vector.load %arg3[%c8, %c0_58, %c0_59] : memref<9x8x128xbf16, #tpu.memory_space<vmem>>, vector<1x8x128xbf16>
    %81 = vector.shape_cast %80 : vector<1x8x128xbf16> to vector<8x128xbf16>
    %cst_60 = arith.constant dense<0.000000e+00> : vector<32x128xf32>
    %82 = tpu.matmul %79, %81, %cst_60 {dimension_numbers = #tpu.dot_dimension_numbers<[1], [0], [0], [1], [0, 0, 1, 1], [], []>} : vector<32x8xbf16>, vector<8x128xbf16>, vector<32x128xf32> -> vector<32x128xf32>
    %83 = arith.addf %74, %82 : vector<32x128xf32>
    %c0_61 = arith.constant 0 : index
    %c0_62 = arith.constant 0 : index
    %84 = vector.load %arg4[%c0_61, %c0_62] : memref<1x128xf32, #tpu.memory_space<vmem>>, vector<1x128xf32>
    %85 = vector.broadcast %84 : vector<1x128xf32> to vector<32x128xf32>
    %86 = arith.addf %83, %85 : vector<32x128xf32>
    %cst_63 = arith.constant 0.000000e+00 : f32
    %87 = vector.broadcast %cst_63 : f32 to vector<32x128xf32>
    %88 = arith.cmpf oge, %86, %87 : vector<32x128xf32>
    %cst_64 = arith.constant 2.000000e-01 : f32
    %89 = vector.broadcast %cst_64 : f32 to vector<32x128xf32>
    %90 = arith.mulf %89, %86 : vector<32x128xf32>
    %91 = arith.select %88, %86, %90 : vector<32x128xi1>, vector<32x128xf32>
    %92 = vector.shape_cast %91 : vector<32x128xf32> to vector<4x8x128xf32>
    %c0_65 = arith.constant 0 : index
    %c0_66 = arith.constant 0 : index
    %c0_67 = arith.constant 0 : index
    %c0_68 = arith.constant 0 : index
    %93 = vector.load %arg5[%c0_65, %c0_66, %c0_67, %c0_68] : memref<1x4x8x128xf32, #tpu.memory_space<vmem>>, vector<1x4x8x128xf32>
    %94 = vector.shape_cast %93 : vector<1x4x8x128xf32> to vector<4x8x128xf32>
    %95 = vector.shape_cast %92 : vector<4x8x128xf32> to vector<1x4x8x128xf32>
    tpu.vector_store %arg5[%c0_65, %c0_66, %c0_67, %c0_68], %95 {strides = array<i32>} : memref<1x4x8x128xf32, #tpu.memory_space<vmem>>, vector<1x4x8x128xf32>,
    return
  }
  func.func @transform_0(%arg0: i32, %arg1: i32) -> (i32, i32, i32, i32) {
    %c0_i32 = arith.constant 0 : i32
    %c0_i32_0 = arith.constant 0 : i32
    %c0_i32_1 = arith.constant 0 : i32
    %c0_i32_2 = arith.constant 0 : i32
    return %arg0, %c0_i32, %c0_i32_0, %c0_i32_1 : i32, i32, i32, i32
  }
  func.func @transform_1(%arg0: i32, %arg1: i32) -> (i32, i32, i32) {
    %c0_i32 = arith.constant 0 : i32
    %c0_i32_0 = arith.constant 0 : i32
    %c0_i32_1 = arith.constant 0 : i32
    %c0_i32_2 = arith.constant 0 : i32
    return %c0_i32, %c0_i32_0, %c0_i32_1 : i32, i32, i32
  }
  func.func @transform_2(%arg0: i32, %arg1: i32) -> (i32, i32) {
    %c0_i32 = arith.constant 0 : i32
    %c0_i32_0 = arith.constant 0 : i32
    %c0_i32_1 = arith.constant 0 : i32
    return %c0_i32, %c0_i32_0 : i32, i32
  }
  func.func @transform_3(%arg0: i32, %arg1: i32) -> (i32, i32, i32, i32) {
    %c0_i32 = arith.constant 0 : i32
    %c0_i32_0 = arith.constant 0 : i32
    %c0_i32_1 = arith.constant 0 : i32
    return %arg0, %arg1, %c0_i32, %c0_i32_0 : i32, i32, i32, i32
  }
}

</mosaic_0001>

<llo_original>
// kernel: down_block.1
$region0: #{down_block.1}
  #allocation0 [shape = 'u32[]', space=smem, size = 0x4, offset = 0x4, fixed_abs, tag = 'smem constant byte address 0x4 - core index']
  #allocation1 [shape = 'u32[144,128]{1,0:T(1,128)}', space=vmem, size = 0x12000, scoped, tag = 'internal scratch']
  %s0 = inlined_call_operand.vmem [shape: bf16[8,9,9,8], index: 0, kind: input, shape index: {}]
  %s1 = inlined_call_operand.vmem [shape: bf16[9,8,128], index: 1, kind: input, shape index: {}]
  %s2 = inlined_call_operand.vmem [shape: f32[1,128], index: 2, kind: input, shape index: {}]
  %s3 = inlined_call_operand.vmem [shape: f32[2,8,8,128], index: 3, kind: output, shape index: {}]
  %s4 = sld [smem:[#allocation0]]
  $region45: #{down_block.1} parent=0
    _
  %s6 = ssub.s32 1, %s4
  %s7 = scalar_select 0, %s6, %s4
  loop: start=0, step=1, limit=6
  $region2: #{down_block.1} parent=0 // loop_pre_header
    _
  $region3: #{down_block.1} parent=0 // loop_header
    %s9 = sphi 0, %s13
    %p10 = scmp.ge.s32.totalorder %s9, 6
    %s16 = sphi 0, %s28
    %s17 = sphi 0, %s24
    %s18 = sphi 0, %s16
    %s19 = sphi 0, %s17
    %s20 = sphi 0, %s18
    %s21 = sphi 0, %s19
    %s31 = sphi 0, %s33
    %s34 = sphi 0, %s31
    %s35 = sphi 0, %s34
    %s51 = sphi 0, %s35
    %s55 = sphi 0, %s55
    %s57 = sphi 0, %s55
    %s58 = sphi 0, %s57
    %s72 = sphi 0, %s58
    %s76 = sphi 0, %s76
    %s78 = sphi 0, %s76
    %s79 = sphi 0, %s78
    %s93 = sphi 0, %s79
    %s101 = sphi 0, %s103
    %s104 = sphi 0, %s101
    %s105 = sphi 0, %s104
    %s121 = sphi 0, %s105
  $region4: #{down_block.1} parent=0 // loop_header_branch
    %12 = sbr.rel (%p10) target = $region8
  $region5: #{down_block.1} parent=0 // loop_body
    %s14 = ssub.s32 %s9, 1
    %s15 = ssub.s32 %s9, 2
    %s22 = sadd.s32 1, %s17
    %p23 = scmp.ge.s32.totalorder %s22, 2
    %s24 = scalar_select %p23, 0, %s22
    %s25 = sadd.s32 1, %s16
    %s26 = scalar_select %p23, %s25, %s16
    %p27 = scmp.ge.s32.totalorder %s26, 2
    %s28 = scalar_select %p27, 0, %s26
    %s29 = ssub.s32 %s16, %s28
    %p30 = scmp.eq.s32.totalorder %s29, 0
    %s32 = sadd.s32 %s31, 1
    %s33 = scalar_select %p30, %s31, %s32
    %p36 = pneg %p30
    %p37 = scmp.eq.s32.totalorder %s9, 3
    %p38 = por %p36, %p37
    %p39 = scmp.ne.s32.totalorder %s31, %s34
    %p40 = scmp.eq.s32.totalorder %s9, 0
    %p41 = por %p39, %p40
    %p42 = scmp.ne.s32.totalorder %s31, %s34
    %p43 = scmp.eq.s32.totalorder %s14, 3
    %p44 = por %p42, %p43
    %p45 = scmp.ne.s32.totalorder %s34, %s35
    %p46 = scmp.eq.s32.totalorder %s14, 0
    %p47 = por %p45, %p46
    %p48 = scmp.ne.s32.totalorder %s34, %s35
    %p49 = scmp.eq.s32.totalorder %s15, 3
    %p50 = por %p48, %p49
    %p52 = scmp.ne.s32.totalorder %s35, %s51
    %p53 = scmp.eq.s32.totalorder %s15, 0
    %p54 = por %p52, %p53
    %s56 = sadd.s32 %s55, 1
    %p59 = scmp.eq.s32.totalorder %s9, 3
    %p60 = scmp.ne.s32.totalorder %s55, %s57
    %p61 = scmp.eq.s32.totalorder %s9, 0
    %p62 = por %p60, %p61
    %p63 = scmp.ne.s32.totalorder %s55, %s57
    %p64 = scmp.eq.s32.totalorder %s14, 3
    %p65 = por %p63, %p64
    %p66 = scmp.ne.s32.totalorder %s57, %s58
    %p67 = scmp.eq.s32.totalorder %s14, 0
    %p68 = por %p66, %p67
    %p69 = scmp.ne.s32.totalorder %s57, %s58
    %p70 = scmp.eq.s32.totalorder %s15, 3
    %p71 = por %p69, %p70
    %p73 = scmp.ne.s32.totalorder %s58, %s72
    %p74 = scmp.eq.s32.totalorder %s15, 0
    %p75 = por %p73, %p74
    %s77 = sadd.s32 %s76, 1
    %p80 = scmp.eq.s32.totalorder %s9, 3
    %p81 = scmp.ne.s32.totalorder %s76, %s78
    %p82 = scmp.eq.s32.totalorder %s9, 0
    %p83 = por %p81, %p82
    %p84 = scmp.ne.s32.totalorder %s76, %s78
    %p85 = scmp.eq.s32.totalorder %s14, 3
    %p86 = por %p84, %p85
    %p87 = scmp.ne.s32.totalorder %s78, %s79
    %p88 = scmp.eq.s32.totalorder %s14, 0
    %p89 = por %p87, %p88
    %p90 = scmp.ne.s32.totalorder %s78, %s79
    %p91 = scmp.eq.s32.totalorder %s15, 3
    %p92 = por %p90, %p91
    %p94 = scmp.ne.s32.totalorder %s79, %s93
    %p95 = scmp.eq.s32.totalorder %s15, 0
    %p96 = por %p94, %p95
    %s97 = ssub.s32 %s16, %s28
    %s98 = ssub.s32 %s17, %s24
    %s99 = sor.u32 %s97, %s98
    %p100 = scmp.eq.s32.totalorder %s99, 0
    %s102 = sadd.s32 %s101, 1
    %s103 = scalar_select %p100, %s101, %s102
    %p106 = pneg %p100
    %p107 = scmp.eq.s32.totalorder %s9, 3
    %p108 = por %p106, %p107
    %p109 = scmp.ne.s32.totalorder %s101, %s104
    %p110 = scmp.eq.s32.totalorder %s9, 0
    %p111 = por %p109, %p110
    %p112 = scmp.ne.s32.totalorder %s101, %s104
    %p113 = scmp.eq.s32.totalorder %s14, 3
    %p114 = por %p112, %p113
    %p115 = scmp.ne.s32.totalorder %s104, %s105
    %p116 = scmp.eq.s32.totalorder %s14, 0
    %p117 = por %p115, %p116
    %p118 = scmp.ne.s32.totalorder %s104, %s105
    %p119 = scmp.eq.s32.totalorder %s15, 3
    %p120 = por %p118, %p119
    %p122 = scmp.ne.s32.totalorder %s105, %s121
    %p123 = scmp.eq.s32.totalorder %s15, 0
    %p124 = por %p122, %p123
    %p125 = scmp.le.s32.totalorder 1, %s9
    %p126 = scmp.lt.s32.totalorder %s9, 5
    %p127 = pnand %p125, %p126
    %p128 = pneg %p127
    // Predicated region
    $region9: #{down_block.1} parent=5 // pred_check
      _
    $region10: #{down_block.1} parent=5 // pred_check_branch
      %130 = sbr.rel (%p127) target = $region12
    $region11: #{down_block.1} parent=5 // pred_region
      %s131 = ssub.s32 %s9, 1
      // Predicated region
      $region13: #{down_block.1} parent=11 // pred_check
        %p132 = pneg %p68
      $region14: #{down_block.1} parent=11 // pred_check_branch
        %134 = sbr.rel (%p132) target = $region16
      $region15: #{down_block.1} parent=11 // pred_region
        _
      $region16: #{down_block.1} parent=11 // pred_fallthru
        _
      // Predicated region
      $region17: #{down_block.1} parent=11 // pred_check
        %p135 = pneg %p89
      $region18: #{down_block.1} parent=11 // pred_check_branch
        %137 = sbr.rel (%p135) target = $region20
      $region19: #{down_block.1} parent=11 // pred_region
        _
      $region20: #{down_block.1} parent=11 // pred_fallthru
        _
    $region12: #{down_block.1} parent=5 // pred_fallthru
      _
    %p138 = scmp.lt.s32.totalorder %s9, 4
    // Predicated region
    $region21: #{down_block.1} parent=5 // pred_check
      %p139 = pneg %p138
    $region22: #{down_block.1} parent=5 // pred_check_branch
      %141 = sbr.rel (%p139) target = $region24
    $region23: #{down_block.1} parent=5 // pred_region
      // Predicated region
      $region25: #{down_block.1} parent=23 // pred_check
        %p142 = pneg %p41
      $region26: #{down_block.1} parent=23 // pred_check_branch
        %144 = sbr.rel (%p142) target = $region28
      $region27: #{down_block.1} parent=23 // pred_region
        %s145 = smul.u32 4, %s16
        %p146 = scmp.lt.s32.totalorder %s145, 7
        %s147 = scalar_select %p146, %s145, 7
        %s148 = smul.addr %s147, 18
        %s149 = smul.addr %s148, 4
        %s150 = scalar_lea.vmem %s0, %s149
        %s151 = smul.u32 4, %s16
      $region28: #{down_block.1} parent=23 // pred_fallthru
        _
    $region24: #{down_block.1} parent=5 // pred_fallthru
      _
    %p152 = scmp.le.s32.totalorder 1, %s9
    %p153 = scmp.lt.s32.totalorder %s9, 5
    %p154 = pnand %p152, %p153
    %p155 = pneg %p154
    // Predicated region
    $region29: #{down_block.1} parent=5 // pred_check
      _
    $region30: #{down_block.1} parent=5 // pred_check_branch
      %157 = sbr.rel (%p154) target = $region32
    $region31: #{down_block.1} parent=5 // pred_region
      %s158 = ssub.s32 %s9, 1
      %s159 = smul.u32 4, %s18
      %p160 = scmp.lt.s32.totalorder %s159, 7
      %s161 = scalar_select %p160, %s159, 7
      %s162 = smul.addr %s161, 18
      %s163 = smul.addr %s162, 4
      %s164 = scalar_lea.vmem %s0, %s163
      %p165 = pneg %p47
      %p166 = pneg %p44
      %p167 = pneg %p68
      %p168 = pneg %p65
      %p169 = pneg %p89
      %p170 = pneg %p86
      %p171 = pneg %p117
      %p172 = pneg %p114
      %s173 = smul.u32 4, %s19
      %p174 = scmp.lt.s32.totalorder %s18, 1
      %s175 = scalar_select %p174, %s18, 1
      %p176 = scmp.lt.s32.totalorder %s173, 7
      %s177 = scalar_select %p176, %s173, 7
      %s178 = smul.addr %s175, 8
      %s179 = sadd.s32 %s177, %s178
      %s180 = smul.addr %s179, 8
      %s181 = scalar_lea.vmem %s3, %s180
      %s182 = smul.u32 4, %s18
      %p183 = scmp.lt.s32.totalorder %s182, 7
      %s184 = scalar_select %p183, %s182, 7
      %s185 = smul.addr %s184, 18
      %s186 = smul.addr %s185, 4
      %s187 = scalar_lea.vmem %s0, %s186
      %s188 = smul.u32 4, %s18
      %s189 = smul.u32 4, %s19
      %p190 = scmp.lt.s32.totalorder %s18, 1
      %s191 = scalar_select %p190, %s18, 1
      %p192 = scmp.lt.s32.totalorder %s189, 7
      %s193 = scalar_select %p192, %s189, 7
      %s194 = smul.addr %s191, 8
      %s195 = sadd.s32 %s193, %s194
      %s196 = smul.addr %s195, 8
      %s197 = scalar_lea.vmem %s3, %s196
      %s198 = smul.u32 4, %s19
      %s200 = smul.u32 %s19, 4
      %s201 = smul.u32 %s200, 2
      %s202 = smul.addr %s201, 4
      %s203 = scalar_lea.vmem %s187, %s202
      %v204 = vld [vmem:[%s203] sm:$0xf]
      %v205 = vld [vmem:[%s203 + $0x8] sm:$0xf]
      %v206 = vld [vmem:[%s203 + $0x10] sm:$0xf]
      %v207 = vld [vmem:[%s203 + $0x18] sm:$0xf]
      %v208 = vld [vmem:[%s1] sm:$0xf]
      %s209 = sadd.s32 %s201, 18
      %s210 = smul.addr %s209, 4
      %s211 = scalar_lea.vmem %s187, %s210
      %v212 = vld [vmem:[%s211] sm:$0xf]
      %v213 = vld [vmem:[%s211 + $0x8] sm:$0xf]
      %v214 = vld [vmem:[%s211 + $0x10] sm:$0xf]
      %v215 = vld [vmem:[%s211 + $0x18] sm:$0xf]
      %s216 = scalar_lea.vmem %s1, 4
      %v217 = vld [vmem:[%s216] sm:$0xf]
      %v222 = vunpack.c.l.b16 %v212
      %v223 = vunpack.c.l.b16 %v213
      %v224 = vunpack.c.l.b16 %v214
      %v225 = vunpack.c.l.b16 %v215
      %v226 = vpack.c.b16 %v223, %v222
      %v227 = vpack.c.b16 %v225, %v224
      %vm228 = vcmask 64512
      %v230 = vsel %vm228, %v226, 0
      %v233 = vsel %vm228, %v227, 0
      %vm235 = vcmask 1043456
      %v237 = vsel %vm235, %v217, 0
      %239 = vmatprep.subr.bf16.mxu0 0
      %240 = vmatpush1.bf16.msra.mxu0 %v237
      %241 = vmatprep.subr.bf16.mxu0 0
      %242 = vmatpush1.bf16.msra.mxu0 0
      %243 = vmatprep.subr.bf16.mxu0 0
      %244 = vmatpush1.bf16.msra.mxu0 0
      %245 = vmatprep.subr.bf16.mxu0 0
      %246 = vmatpush1.bf16.msra.mxu0 0
      %247 = vmatprep.subr.bf16.mxu0 0
      %248 = vmatpush1.bf16.msra.mxu0 0
      %249 = vmatprep.subr.bf16.mxu0 0
      %250 = vmatpush1.bf16.msra.mxu0 0
      %251 = vmatprep.subr.bf16.mxu0 0
      %252 = vmatpush1.bf16.msra.mxu0 0
      %253 = vmatprep.subr.bf16.mxu0 0
      %254 = vmatpush1.bf16.msra.mxu0 0
      %255 = vmatprep.subr.bf16.mxu0 0
      %256 = vmatpush1.bf16.msra.mxu0 0
      %257 = vmatprep.subr.bf16.mxu0 0
      %258 = vmatpush1.bf16.msra.mxu0 0
      %259 = vmatprep.subr.bf16.mxu0 0
      %260 = vmatpush1.bf16.msra.mxu0 0
      %261 = vmatprep.subr.bf16.mxu0 0
      %262 = vmatpush1.bf16.msra.mxu0 0
      %263 = vmatprep.subr.bf16.mxu0 0
      %264 = vmatpush1.bf16.msra.mxu0 0
      %265 = vmatprep.subr.bf16.mxu0 0
      %266 = vmatpush1.bf16.msra.mxu0 0
      %267 = vmatprep.subr.bf16.mxu0 0
      %268 = vmatpush1.bf16.msra.mxu0 0
      %269 = vmatprep.subr.bf16.mxu0 0
      %270 = vmatpush1.bf16.msra.mxu0 0
      %271 = vmatprep.mubr.bf16.mxu0 0
      %272 = vmatmul.mubr.bf16.gmra.mrb[0].mxu0 %v230
      %v273 = vpop.f32.mrb[0].mxu0
      %v274 = vadd.f32 0.0, %v273
      %v275 = vpop.f32.mrb[0].mxu0
      %v276 = vpop.f32.mrb[0].mxu0
      %v277 = vadd.f32 0.0, %v276
      %v278 = vpop.f32.mrb[0].mxu0
      %279 = vmatprep.mubr.bf16.mxu0 0
      %280 = vmatmul.mubr.bf16.gmra.mrb[0].mxu0 %v233
      %v281 = vpop.f32.mrb[0].mxu0
      %v282 = vadd.f32 0.0, %v281
      %v283 = vpop.f32.mrb[0].mxu0
      %v284 = vpop.f32.mrb[0].mxu0
      %v285 = vadd.f32 0.0, %v284
      %v286 = vpop.f32.mrb[0].mxu0
      %287 = vdwg.mxu0
      %v292 = vunpack.c.l.b16 %v204
      %v293 = vunpack.c.l.b16 %v205
      %v294 = vunpack.c.l.b16 %v206
      %v295 = vunpack.c.l.b16 %v207
      %v296 = vpack.c.b16 %v293, %v292
      %v297 = vpack.c.b16 %v295, %v294
      %v299 = vsel %vm228, %v296, 0
      %v302 = vsel %vm228, %v297, 0
      %v305 = vsel %vm235, %v208, 0
      %307 = vmatprep.subr.bf16.mxu0 0
      %308 = vmatpush1.bf16.msra.mxu0 %v305
      %309 = vmatprep.subr.bf16.mxu0 0
      %310 = vmatpush1.bf16.msra.mxu0 0
      %311 = vmatprep.subr.bf16.mxu0 0
      %312 = vmatpush1.bf16.msra.mxu0 0
      %313 = vmatprep.subr.bf16.mxu0 0
      %314 = vmatpush1.bf16.msra.mxu0 0
      %315 = vmatprep.subr.bf16.mxu0 0
      %316 = vmatpush1.bf16.msra.mxu0 0
      %317 = vmatprep.subr.bf16.mxu0 0
      %318 = vmatpush1.bf16.msra.mxu0 0
      %319 = vmatprep.subr.bf16.mxu0 0
      %320 = vmatpush1.bf16.msra.mxu0 0
      %321 = vmatprep.subr.bf16.mxu0 0
      %322 = vmatpush1.bf16.msra.mxu0 0
      %323 = vmatprep.subr.bf16.mxu0 0
      %324 = vmatpush1.bf16.msra.mxu0 0
      %325 = vmatprep.subr.bf16.mxu0 0
      %326 = vmatpush1.bf16.msra.mxu0 0
      %327 = vmatprep.subr.bf16.mxu0 0
      %328 = vmatpush1.bf16.msra.mxu0 0
      %329 = vmatprep.subr.bf16.mxu0 0
      %330 = vmatpush1.bf16.msra.mxu0 0
      %331 = vmatprep.subr.bf16.mxu0 0
      %332 = vmatpush1.bf16.msra.mxu0 0
      %333 = vmatprep.subr.bf16.mxu0 0
      %334 = vmatpush1.bf16.msra.mxu0 0
      %335 = vmatprep.subr.bf16.mxu0 0
      %336 = vmatpush1.bf16.msra.mxu0 0
      %337 = vmatprep.subr.bf16.mxu0 0
      %338 = vmatpush1.bf16.msra.mxu0 0
      %339 = vmatprep.mubr.bf16.mxu0 0
      %340 = vmatmul.mubr.bf16.gmra.mrb[0].mxu0 %v299
      %v341 = vpop.f32.mrb[0].mxu0
      %v342 = vadd.f32 %v274, %v341
      %v343 = vpop.f32.mrb[0].mxu0
      %v344 = vpop.f32.mrb[0].mxu0
      %v345 = vadd.f32 %v277, %v344
      %v346 = vpop.f32.mrb[0].mxu0
      %347 = vmatprep.mubr.bf16.mxu0 0
      %348 = vmatmul.mubr.bf16.gmra.mrb[0].mxu0 %v302
      %v349 = vpop.f32.mrb[0].mxu0
      %v350 = vadd.f32 %v282, %v349
      %v351 = vpop.f32.mrb[0].mxu0
      %v352 = vpop.f32.mrb[0].mxu0
      %v353 = vadd.f32 %v285, %v352
      %v354 = vpop.f32.mrb[0].mxu0
      %355 = vdwg.mxu0
      %v356 = vld [vmem:[%s203] sm:$0xf]
      %v357 = vld [vmem:[%s203 + $0x4] sm:$0x1]
      %v358 = vld [vmem:[%s203 + $0x8] sm:$0xf]
      %v359 = vld [vmem:[%s203 + $0xc] sm:$0x1]
      %v360 = vld [vmem:[%s203 + $0x10] sm:$0xf]
      %v361 = vld [vmem:[%s203 + $0x14] sm:$0x1]
      %v362 = vld [vmem:[%s203 + $0x18] sm:$0xf]
      %v363 = vld [vmem:[%s203 + $0x1c] sm:$0x1]
      %vm364 = vsmask.f32 3328
      %vm365 = vsmask.f32 7440
      %vm366 = vmor %vm364, %vm365
      %v368 = vshrl.u32 %v356, 16
      %v370 = vrot.slane %v368, 4
      %v371 = vshll.u32 %v356, 16
      %v373 = vrot.slane %v371, 5
      %v374 = vor.u32 %v370, %v373
      %v375 = vrot.slane %v374, 4
      %v377 = vshll.u32 %v357, 16
      %v379 = vrot.slane %v377, 5
      %v380 = vsel %vm366, %v375, %v379
      %v382 = vshrl.u32 %v358, 16
      %v384 = vrot.slane %v382, 4
      %v385 = vshll.u32 %v358, 16
      %v387 = vrot.slane %v385, 5
      %v388 = vor.u32 %v384, %v387
      %v389 = vrot.slane %v388, 4
      %v391 = vshll.u32 %v359, 16
      %v393 = vrot.slane %v391, 5
      %v394 = vsel %vm366, %v389, %v393
      %v396 = vshrl.u32 %v360, 16
      %v398 = vrot.slane %v396, 4
      %v399 = vshll.u32 %v360, 16
      %v401 = vrot.slane %v399, 5
      %v402 = vor.u32 %v398, %v401
      %v403 = vrot.slane %v402, 4
      %v405 = vshll.u32 %v361, 16
      %v407 = vrot.slane %v405, 5
      %v408 = vsel %vm366, %v403, %v407
      %v410 = vshrl.u32 %v362, 16
      %v412 = vrot.slane %v410, 4
      %v413 = vshll.u32 %v362, 16
      %v415 = vrot.slane %v413, 5
      %v416 = vor.u32 %v412, %v415
      %v417 = vrot.slane %v416, 4
      %v419 = vshll.u32 %v363, 16
      %v421 = vrot.slane %v419, 5
      %v422 = vsel %vm366, %v417, %v421
      %s423 = scalar_lea.vmem %s1, 8
      %v424 = vld [vmem:[%s423] sm:$0xf]
      %v425 = vunpack.c.l.b16 %v380
      %v426 = vunpack.c.l.b16 %v394
      %v427 = vunpack.c.l.b16 %v408
      %v428 = vunpack.c.l.b16 %v422
      %v429 = vpack.c.b16 %v426, %v425
      %v430 = vpack.c.b16 %v428, %v427
      %v432 = vsel %vm228, %v429, 0
      %v435 = vsel %vm228, %v430, 0
      %v438 = vsel %vm235, %v424, 0
      %440 = vmatprep.subr.bf16.mxu0 0
      %441 = vmatpush1.bf16.msra.mxu0 %v438
      %442 = vmatprep.subr.bf16.mxu0 0
      %443 = vmatpush1.bf16.msra.mxu0 0
      %444 = vmatprep.subr.bf16.mxu0 0
      %445 = vmatpush1.bf16.msra.mxu0 0
      %446 = vmatprep.subr.bf16.mxu0 0
      %447 = vmatpush1.bf16.msra.mxu0 0
      %448 = vmatprep.subr.bf16.mxu0 0
      %449 = vmatpush1.bf16.msra.mxu0 0
      %450 = vmatprep.subr.bf16.mxu0 0
      %451 = vmatpush1.bf16.msra.mxu0 0
      %452 = vmatprep.subr.bf16.mxu0 0
      %453 = vmatpush1.bf16.msra.mxu0 0
      %454 = vmatprep.subr.bf16.mxu0 0
      %455 = vmatpush1.bf16.msra.mxu0 0
      %456 = vmatprep.subr.bf16.mxu0 0
      %457 = vmatpush1.bf16.msra.mxu0 0
      %458 = vmatprep.subr.bf16.mxu0 0
      %459 = vmatpush1.bf16.msra.mxu0 0
      %460 = vmatprep.subr.bf16.mxu0 0
      %461 = vmatpush1.bf16.msra.mxu0 0
      %462 = vmatprep.subr.bf16.mxu0 0
      %463 = vmatpush1.bf16.msra.mxu0 0
      %464 = vmatprep.subr.bf16.mxu0 0
      %465 = vmatpush1.bf16.msra.mxu0 0
      %466 = vmatprep.subr.bf16.mxu0 0
      %467 = vmatpush1.bf16.msra.mxu0 0
      %468 = vmatprep.subr.bf16.mxu0 0
      %469 = vmatpush1.bf16.msra.mxu0 0
      %470 = vmatprep.subr.bf16.mxu0 0
      %471 = vmatpush1.bf16.msra.mxu0 0
      %472 = vmatprep.mubr.bf16.mxu0 0
      %473 = vmatmul.mubr.bf16.gmra.mrb[0].mxu0 %v432
      %v474 = vpop.f32.mrb[0].mxu0
      %v475 = vadd.f32 0.0, %v474
      %v476 = vpop.f32.mrb[0].mxu0
      %v477 = vpop.f32.mrb[0].mxu0
      %v478 = vadd.f32 0.0, %v477
      %v479 = vpop.f32.mrb[0].mxu0
      %480 = vmatprep.mubr.bf16.mxu0 0
      %481 = vmatmul.mubr.bf16.gmra.mrb[0].mxu0 %v435
      %v482 = vpop.f32.mrb[0].mxu0
      %v483 = vadd.f32 0.0, %v482
      %v484 = vpop.f32.mrb[0].mxu0
      %v485 = vpop.f32.mrb[0].mxu0
      %v486 = vadd.f32 0.0, %v485
      %v487 = vpop.f32.mrb[0].mxu0
      %488 = vdwg.mxu0
      %v489 = vadd.f32 %v342, %v475
      %v490 = vadd.f32 %v345, %v478
      %v491 = vadd.f32 %v350, %v483
      %v492 = vadd.f32 %v353, %v486
      %s493 = sadd.s32 %s201, 36
      %s494 = smul.addr %s493, 4
      %s495 = scalar_lea.vmem %s187, %s494
      %v496 = vld [vmem:[%s495] sm:$0xf]
      %v497 = vld [vmem:[%s495 + $0x8] sm:$0xf]
      %v498 = vld [vmem:[%s495 + $0x10] sm:$0xf]
      %v499 = vld [vmem:[%s495 + $0x18] sm:$0xf]
      %s500 = scalar_lea.vmem %s1, 12
      %v501 = vld [vmem:[%s500] sm:$0xf]
      %v506 = vunpack.c.l.b16 %v496
      %v507 = vunpack.c.l.b16 %v497
      %v508 = vunpack.c.l.b16 %v498
      %v509 = vunpack.c.l.b16 %v499
      %v510 = vpack.c.b16 %v507, %v506
      %v511 = vpack.c.b16 %v509, %v508
      %v513 = vsel %vm228, %v510, 0
      %v516 = vsel %vm228, %v511, 0
      %v519 = vsel %vm235, %v501, 0
      %521 = vmatprep.subr.bf16.mxu0 0
      %522 = vmatpush1.bf16.msra.mxu0 %v519
      %523 = vmatprep.subr.bf16.mxu0 0
      %524 = vmatpush1.bf16.msra.mxu0 0
      %525 = vmatprep.subr.bf16.mxu0 0
      %526 = vmatpush1.bf16.msra.mxu0 0
      %527 = vmatprep.subr.bf16.mxu0 0
      %528 = vmatpush1.bf16.msra.mxu0 0
      %529 = vmatprep.subr.bf16.mxu0 0
      %530 = vmatpush1.bf16.msra.mxu0 0
      %531 = vmatprep.subr.bf16.mxu0 0
      %532 = vmatpush1.bf16.msra.mxu0 0
      %533 = vmatprep.subr.bf16.mxu0 0
      %534 = vmatpush1.bf16.msra.mxu0 0
      %535 = vmatprep.subr.bf16.mxu0 0
      %536 = vmatpush1.bf16.msra.mxu0 0
      %537 = vmatprep.subr.bf16.mxu0 0
      %538 = vmatpush1.bf16.msra.mxu0 0
      %539 = vmatprep.subr.bf16.mxu0 0
      %540 = vmatpush1.bf16.msra.mxu0 0
      %541 = vmatprep.subr.bf16.mxu0 0
      %542 = vmatpush1.bf16.msra.mxu0 0
      %543 = vmatprep.subr.bf16.mxu0 0
      %544 = vmatpush1.bf16.msra.mxu0 0
      %545 = vmatprep.subr.bf16.mxu0 0
      %546 = vmatpush1.bf16.msra.mxu0 0
      %547 = vmatprep.subr.bf16.mxu0 0
      %548 = vmatpush1.bf16.msra.mxu0 0
      %549 = vmatprep.subr.bf16.mxu0 0
      %550 = vmatpush1.bf16.msra.mxu0 0
      %551 = vmatprep.subr.bf16.mxu0 0
      %552 = vmatpush1.bf16.msra.mxu0 0
      %553 = vmatprep.mubr.bf16.mxu0 0
      %554 = vmatmul.mubr.bf16.gmra.mrb[0].mxu0 %v513
      %v555 = vpop.f32.mrb[0].mxu0
      %v556 = vadd.f32 0.0, %v555
      %v557 = vpop.f32.mrb[0].mxu0
      %v558 = vpop.f32.mrb[0].mxu0
      %v559 = vadd.f32 0.0, %v558
      %v560 = vpop.f32.mrb[0].mxu0
      %561 = vmatprep.mubr.bf16.mxu0 0
      %562 = vmatmul.mubr.bf16.gmra.mrb[0].mxu0 %v516
      %v563 = vpop.f32.mrb[0].mxu0
      %v564 = vadd.f32 0.0, %v563
      %v565 = vpop.f32.mrb[0].mxu0
      %v566 = vpop.f32.mrb[0].mxu0
      %v567 = vadd.f32 0.0, %v566
      %v568 = vpop.f32.mrb[0].mxu0
      %569 = vdwg.mxu0
      %v570 = vadd.f32 %v489, %v556
      %v571 = vadd.f32 %v490, %v559
      %v572 = vadd.f32 %v491, %v564
      %v573 = vadd.f32 %v492, %v567
      %s574 = sadd.s32 %s201, 54
      %s575 = smul.addr %s574, 4
      %s576 = scalar_lea.vmem %s187, %s575
      %v577 = vld [vmem:[%s576] sm:$0xf]
      %v578 = vld [vmem:[%s576 + $0x8] sm:$0xf]
      %v579 = vld [vmem:[%s576 + $0x10] sm:$0xf]
      %v580 = vld [vmem:[%s576 + $0x18] sm:$0xf]
      %s581 = scalar_lea.vmem %s1, 16
      %v582 = vld [vmem:[%s581] sm:$0xf]
      %v587 = vunpack.c.l.b16 %v577
      %v588 = vunpack.c.l.b16 %v578
      %v589 = vunpack.c.l.b16 %v579
      %v590 = vunpack.c.l.b16 %v580
      %v591 = vpack.c.b16 %v588, %v587
      %v592 = vpack.c.b16 %v590, %v589
      %v594 = vsel %vm228, %v591, 0
      %v597 = vsel %vm228, %v592, 0
      %v600 = vsel %vm235, %v582, 0
      %602 = vmatprep.subr.bf16.mxu0 0
      %603 = vmatpush1.bf16.msra.mxu0 %v600
      %604 = vmatprep.subr.bf16.mxu0 0
      %605 = vmatpush1.bf16.msra.mxu0 0
      %606 = vmatprep.subr.bf16.mxu0 0
      %607 = vmatpush1.bf16.msra.mxu0 0
      %608 = vmatprep.subr.bf16.mxu0 0
      %609 = vmatpush1.bf16.msra.mxu0 0
      %610 = vmatprep.subr.bf16.mxu0 0
      %611 = vmatpush1.bf16.msra.mxu0 0
      %612 = vmatprep.subr.bf16.mxu0 0
      %613 = vmatpush1.bf16.msra.mxu0 0
      %614 = vmatprep.subr.bf16.mxu0 0
      %615 = vmatpush1.bf16.msra.mxu0 0
      %616 = vmatprep.subr.bf16.mxu0 0
      %617 = vmatpush1.bf16.msra.mxu0 0
      %618 = vmatprep.subr.bf16.mxu0 0
      %619 = vmatpush1.bf16.msra.mxu0 0
      %620 = vmatprep.subr.bf16.mxu0 0
      %621 = vmatpush1.bf16.msra.mxu0 0
      %622 = vmatprep.subr.bf16.mxu0 0
      %623 = vmatpush1.bf16.msra.mxu0 0
      %624 = vmatprep.subr.bf16.mxu0 0
      %625 = vmatpush1.bf16.msra.mxu0 0
      %626 = vmatprep.subr.bf16.mxu0 0
      %627 = vmatpush1.bf16.msra.mxu0 0
      %628 = vmatprep.subr.bf16.mxu0 0
      %629 = vmatpush1.bf16.msra.mxu0 0
      %630 = vmatprep.subr.bf16.mxu0 0
      %631 = vmatpush1.bf16.msra.mxu0 0
      %632 = vmatprep.subr.bf16.mxu0 0
      %633 = vmatpush1.bf16.msra.mxu0 0
      %634 = vmatprep.mubr.bf16.mxu0 0
      %635 = vmatmul.mubr.bf16.gmra.mrb[0].mxu0 %v594
      %v636 = vpop.f32.mrb[0].mxu0
      %v637 = vadd.f32 0.0, %v636
      %v638 = vpop.f32.mrb[0].mxu0
      %v639 = vpop.f32.mrb[0].mxu0
      %v640 = vadd.f32 0.0, %v639
      %v641 = vpop.f32.mrb[0].mxu0
      %642 = vmatprep.mubr.bf16.mxu0 0
      %643 = vmatmul.mubr.bf16.gmra.mrb[0].mxu0 %v597
      %v644 = vpop.f32.mrb[0].mxu0
      %v645 = vadd.f32 0.0, %v644
      %v646 = vpop.f32.mrb[0].mxu0
      %v647 = vpop.f32.mrb[0].mxu0
      %v648 = vadd.f32 0.0, %v647
      %v649 = vpop.f32.mrb[0].mxu0
      %650 = vdwg.mxu0
      %v651 = vadd.f32 %v570, %v637
      %v652 = vadd.f32 %v571, %v640
      %v653 = vadd.f32 %v572, %v645
      %v654 = vadd.f32 %v573, %v648
      %v655 = vld [vmem:[%s495] sm:$0xf]
      %v656 = vld [vmem:[%s495 + $0x4] sm:$0x1]
      %v657 = vld [vmem:[%s495 + $0x8] sm:$0xf]
      %v658 = vld [vmem:[%s495 + $0xc] sm:$0x1]
      %v659 = vld [vmem:[%s495 + $0x10] sm:$0xf]
      %v660 = vld [vmem:[%s495 + $0x14] sm:$0x1]
      %v661 = vld [vmem:[%s495 + $0x18] sm:$0xf]
      %v662 = vld [vmem:[%s495 + $0x1c] sm:$0x1]
      %v664 = vshrl.u32 %v655, 16
      %v666 = vrot.slane %v664, 4
      %v667 = vshll.u32 %v655, 16
      %v669 = vrot.slane %v667, 5
      %v670 = vor.u32 %v666, %v669
      %v671 = vrot.slane %v670, 4
      %v673 = vshll.u32 %v656, 16
      %v675 = vrot.slane %v673, 5
      %v676 = vsel %vm366, %v671, %v675
      %v678 = vshrl.u32 %v657, 16
      %v680 = vrot.slane %v678, 4
      %v681 = vshll.u32 %v657, 16
      %v683 = vrot.slane %v681, 5
      %v684 = vor.u32 %v680, %v683
      %v685 = vrot.slane %v684, 4
      %v687 = vshll.u32 %v658, 16
      %v689 = vrot.slane %v687, 5
      %v690 = vsel %vm366, %v685, %v689
      %v692 = vshrl.u32 %v659, 16
      %v694 = vrot.slane %v692, 4
      %v695 = vshll.u32 %v659, 16
      %v697 = vrot.slane %v695, 5
      %v698 = vor.u32 %v694, %v697
      %v699 = vrot.slane %v698, 4
      %v701 = vshll.u32 %v660, 16
      %v703 = vrot.slane %v701, 5
      %v704 = vsel %vm366, %v699, %v703
      %v706 = vshrl.u32 %v661, 16
      %v708 = vrot.slane %v706, 4
      %v709 = vshll.u32 %v661, 16
      %v711 = vrot.slane %v709, 5
      %v712 = vor.u32 %v708, %v711
      %v713 = vrot.slane %v712, 4
      %v715 = vshll.u32 %v662, 16
      %v717 = vrot.slane %v715, 5
      %v718 = vsel %vm366, %v713, %v717
      %s719 = scalar_lea.vmem %s1, 20
      %v720 = vld [vmem:[%s719] sm:$0xf]
      %v721 = vunpack.c.l.b16 %v676
      %v722 = vunpack.c.l.b16 %v690
      %v723 = vunpack.c.l.b16 %v704
      %v724 = vunpack.c.l.b16 %v718
      %v725 = vpack.c.b16 %v722, %v721
      %v726 = vpack.c.b16 %v724, %v723
      %v728 = vsel %vm228, %v725, 0
      %v731 = vsel %vm228, %v726, 0
      %v734 = vsel %vm235, %v720, 0
      %736 = vmatprep.subr.bf16.mxu0 0
      %737 = vmatpush1.bf16.msra.mxu0 %v734
      %738 = vmatprep.subr.bf16.mxu0 0
      %739 = vmatpush1.bf16.msra.mxu0 0
      %740 = vmatprep.subr.bf16.mxu0 0
      %741 = vmatpush1.bf16.msra.mxu0 0
      %742 = vmatprep.subr.bf16.mxu0 0
      %743 = vmatpush1.bf16.msra.mxu0 0
      %744 = vmatprep.subr.bf16.mxu0 0
      %745 = vmatpush1.bf16.msra.mxu0 0
      %746 = vmatprep.subr.bf16.mxu0 0
      %747 = vmatpush1.bf16.msra.mxu0 0
      %748 = vmatprep.subr.bf16.mxu0 0
      %749 = vmatpush1.bf16.msra.mxu0 0
      %750 = vmatprep.subr.bf16.mxu0 0
      %751 = vmatpush1.bf16.msra.mxu0 0
      %752 = vmatprep.subr.bf16.mxu0 0
      %753 = vmatpush1.bf16.msra.mxu0 0
      %754 = vmatprep.subr.bf16.mxu0 0
      %755 = vmatpush1.bf16.msra.mxu0 0
      %756 = vmatprep.subr.bf16.mxu0 0
      %757 = vmatpush1.bf16.msra.mxu0 0
      %758 = vmatprep.subr.bf16.mxu0 0
      %759 = vmatpush1.bf16.msra.mxu0 0
      %760 = vmatprep.subr.bf16.mxu0 0
      %761 = vmatpush1.bf16.msra.mxu0 0
      %762 = vmatprep.subr.bf16.mxu0 0
      %763 = vmatpush1.bf16.msra.mxu0 0
      %764 = vmatprep.subr.bf16.mxu0 0
      %765 = vmatpush1.bf16.msra.mxu0 0
      %766 = vmatprep.subr.bf16.mxu0 0
      %767 = vmatpush1.bf16.msra.mxu0 0
      %768 = vmatprep.mubr.bf16.mxu0 0
      %769 = vmatmul.mubr.bf16.gmra.mrb[0].mxu0 %v728
      %v770 = vpop.f32.mrb[0].mxu0
      %v771 = vadd.f32 0.0, %v770
      %v772 = vpop.f32.mrb[0].mxu0
      %v773 = vpop.f32.mrb[0].mxu0
      %v774 = vadd.f32 0.0, %v773
      %v775 = vpop.f32.mrb[0].mxu0
      %776 = vmatprep.mubr.bf16.mxu0 0
      %777 = vmatmul.mubr.bf16.gmra.mrb[0].mxu0 %v731
      %v778 = vpop.f32.mrb[0].mxu0
      %v779 = vadd.f32 0.0, %v778
      %v780 = vpop.f32.mrb[0].mxu0
      %v781 = vpop.f32.mrb[0].mxu0
      %v782 = vadd.f32 0.0, %v781
      %v783 = vpop.f32.mrb[0].mxu0
      %784 = vdwg.mxu0
      %v785 = vadd.f32 %v651, %v771
      %v786 = vadd.f32 %v652, %v774
      %v787 = vadd.f32 %v653, %v779
      %v788 = vadd.f32 %v654, %v782
      %s789 = sadd.s32 %s200, 1
      %s790 = smul.u32 %s789, 2
      %s791 = smul.addr %s790, 4
      %s792 = scalar_lea.vmem %s187, %s791
      %v793 = vld [vmem:[%s792] sm:$0xf]
      %v794 = vld [vmem:[%s792 + $0x8] sm:$0xf]
      %v795 = vld [vmem:[%s792 + $0x10] sm:$0xf]
      %v796 = vld [vmem:[%s792 + $0x18] sm:$0xf]
      %s797 = scalar_lea.vmem %s1, 24
      %v798 = vld [vmem:[%s797] sm:$0xf]
      %v803 = vunpack.c.l.b16 %v793
      %v804 = vunpack.c.l.b16 %v794
      %v805 = vunpack.c.l.b16 %v795
      %v806 = vunpack.c.l.b16 %v796
      %v807 = vpack.c.b16 %v804, %v803
      %v808 = vpack.c.b16 %v806, %v805
      %v810 = vsel %vm228, %v807, 0
      %v813 = vsel %vm228, %v808, 0
      %v816 = vsel %vm235, %v798, 0
      %818 = vmatprep.subr.bf16.mxu0 0
      %819 = vmatpush1.bf16.msra.mxu0 %v816
      %820 = vmatprep.subr.bf16.mxu0 0
      %821 = vmatpush1.bf16.msra.mxu0 0
      %822 = vmatprep.subr.bf16.mxu0 0
      %823 = vmatpush1.bf16.msra.mxu0 0
      %824 = vmatprep.subr.bf16.mxu0 0
      %825 = vmatpush1.bf16.msra.mxu0 0
      %826 = vmatprep.subr.bf16.mxu0 0
      %827 = vmatpush1.bf16.msra.mxu0 0
      %828 = vmatprep.subr.bf16.mxu0 0
      %829 = vmatpush1.bf16.msra.mxu0 0
      %830 = vmatprep.subr.bf16.mxu0 0
      %831 = vmatpush1.bf16.msra.mxu0 0
      %832 = vmatprep.subr.bf16.mxu0 0
      %833 = vmatpush1.bf16.msra.mxu0 0
      %834 = vmatprep.subr.bf16.mxu0 0
      %835 = vmatpush1.bf16.msra.mxu0 0
      %836 = vmatprep.subr.bf16.mxu0 0
      %837 = vmatpush1.bf16.msra.mxu0 0
      %838 = vmatprep.subr.bf16.mxu0 0
      %839 = vmatpush1.bf16.msra.mxu0 0
      %840 = vmatprep.subr.bf16.mxu0 0
      %841 = vmatpush1.bf16.msra.mxu0 0
      %842 = vmatprep.subr.bf16.mxu0 0
      %843 = vmatpush1.bf16.msra.mxu0 0
      %844 = vmatprep.subr.bf16.mxu0 0
      %845 = vmatpush1.bf16.msra.mxu0 0
      %846 = vmatprep.subr.bf16.mxu0 0
      %847 = vmatpush1.bf16.msra.mxu0 0
      %848 = vmatprep.subr.bf16.mxu0 0
      %849 = vmatpush1.bf16.msra.mxu0 0
      %850 = vmatprep.mubr.bf16.mxu0 0
      %851 = vmatmul.mubr.bf16.gmra.mrb[0].mxu0 %v810
      %v852 = vpop.f32.mrb[0].mxu0
      %v853 = vadd.f32 0.0, %v852
      %v854 = vpop.f32.mrb[0].mxu0
      %v855 = vpop.f32.mrb[0].mxu0
      %v856 = vadd.f32 0.0, %v855
      %v857 = vpop.f32.mrb[0].mxu0
      %858 = vmatprep.mubr.bf16.mxu0 0
      %859 = vmatmul.mubr.bf16.gmra.mrb[0].mxu0 %v813
      %v860 = vpop.f32.mrb[0].mxu0
      %v861 = vadd.f32 0.0, %v860
      %v862 = vpop.f32.mrb[0].mxu0
      %v863 = vpop.f32.mrb[0].mxu0
      %v864 = vadd.f32 0.0, %v863
      %v865 = vpop.f32.mrb[0].mxu0
      %866 = vdwg.mxu0
      %v867 = vadd.f32 %v785, %v853
      %v868 = vadd.f32 %v786, %v856
      %v869 = vadd.f32 %v787, %v861
      %v870 = vadd.f32 %v788, %v864
      %s871 = sadd.s32 %s790, 18
      %s872 = smul.addr %s871, 4
      %s873 = scalar_lea.vmem %s187, %s872
      %v874 = vld [vmem:[%s873] sm:$0xf]
      %v875 = vld [vmem:[%s873 + $0x8] sm:$0xf]
      %v876 = vld [vmem:[%s873 + $0x10] sm:$0xf]
      %v877 = vld [vmem:[%s873 + $0x18] sm:$0xf]
      %s878 = scalar_lea.vmem %s1, 28
      %v879 = vld [vmem:[%s878] sm:$0xf]
      %v884 = vunpack.c.l.b16 %v874
      %v885 = vunpack.c.l.b16 %v875
      %v886 = vunpack.c.l.b16 %v876
      %v887 = vunpack.c.l.b16 %v877
      %v888 = vpack.c.b16 %v885, %v884
      %v889 = vpack.c.b16 %v887, %v886
      %v891 = vsel %vm228, %v888, 0
      %v894 = vsel %vm228, %v889, 0
      %v897 = vsel %vm235, %v879, 0
      %899 = vmatprep.subr.bf16.mxu0 0
      %900 = vmatpush1.bf16.msra.mxu0 %v897
      %901 = vmatprep.subr.bf16.mxu0 0
      %902 = vmatpush1.bf16.msra.mxu0 0
      %903 = vmatprep.subr.bf16.mxu0 0
      %904 = vmatpush1.bf16.msra.mxu0 0
      %905 = vmatprep.subr.bf16.mxu0 0
      %906 = vmatpush1.bf16.msra.mxu0 0
      %907 = vmatprep.subr.bf16.mxu0 0
      %908 = vmatpush1.bf16.msra.mxu0 0
      %909 = vmatprep.subr.bf16.mxu0 0
      %910 = vmatpush1.bf16.msra.mxu0 0
      %911 = vmatprep.subr.bf16.mxu0 0
      %912 = vmatpush1.bf16.msra.mxu0 0
      %913 = vmatprep.subr.bf16.mxu0 0
      %914 = vmatpush1.bf16.msra.mxu0 0
      %915 = vmatprep.subr.bf16.mxu0 0
      %916 = vmatpush1.bf16.msra.mxu0 0
      %917 = vmatprep.subr.bf16.mxu0 0
      %918 = vmatpush1.bf16.msra.mxu0 0
      %919 = vmatprep.subr.bf16.mxu0 0
      %920 = vmatpush1.bf16.msra.mxu0 0
      %921 = vmatprep.subr.bf16.mxu0 0
      %922 = vmatpush1.bf16.msra.mxu0 0
      %923 = vmatprep.subr.bf16.mxu0 0
      %924 = vmatpush1.bf16.msra.mxu0 0
      %925 = vmatprep.subr.bf16.mxu0 0
      %926 = vmatpush1.bf16.msra.mxu0 0
      %927 = vmatprep.subr.bf16.mxu0 0
      %928 = vmatpush1.bf16.msra.mxu0 0
      %929 = vmatprep.subr.bf16.mxu0 0
      %930 = vmatpush1.bf16.msra.mxu0 0
      %931 = vmatprep.mubr.bf16.mxu0 0
      %932 = vmatmul.mubr.bf16.gmra.mrb[0].mxu0 %v891
      %v933 = vpop.f32.mrb[0].mxu0
      %v934 = vadd.f32 0.0, %v933
      %v935 = vpop.f32.mrb[0].mxu0
      %v936 = vpop.f32.mrb[0].mxu0
      %v937 = vadd.f32 0.0, %v936
      %v938 = vpop.f32.mrb[0].mxu0
      %939 = vmatprep.mubr.bf16.mxu0 0
      %940 = vmatmul.mubr.bf16.gmra.mrb[0].mxu0 %v894
      %v941 = vpop.f32.mrb[0].mxu0
      %v942 = vadd.f32 0.0, %v941
      %v943 = vpop.f32.mrb[0].mxu0
      %v944 = vpop.f32.mrb[0].mxu0
      %v945 = vadd.f32 0.0, %v944
      %v946 = vpop.f32.mrb[0].mxu0
      %947 = vdwg.mxu0
      %v948 = vadd.f32 %v867, %v934
      %v949 = vadd.f32 %v868, %v937
      %v950 = vadd.f32 %v869, %v942
      %v951 = vadd.f32 %v870, %v945
      %v952 = vld [vmem:[%s792] sm:$0xf]
      %v953 = vld [vmem:[%s792 + $0x4] sm:$0x1]
      %v954 = vld [vmem:[%s792 + $0x8] sm:$0xf]
      %v955 = vld [vmem:[%s792 + $0xc] sm:$0x1]
      %v956 = vld [vmem:[%s792 + $0x10] sm:$0xf]
      %v957 = vld [vmem:[%s792 + $0x14] sm:$0x1]
      %v958 = vld [vmem:[%s792 + $0x18] sm:$0xf]
      %v959 = vld [vmem:[%s792 + $0x1c] sm:$0x1]
      %v961 = vshrl.u32 %v952, 16
      %v963 = vrot.slane %v961, 4
      %v964 = vshll.u32 %v952, 16
      %v966 = vrot.slane %v964, 5
      %v967 = vor.u32 %v963, %v966
      %v968 = vrot.slane %v967, 4
      %v970 = vshll.u32 %v953, 16
      %v972 = vrot.slane %v970, 5
      %v973 = vsel %vm366, %v968, %v972
      %v975 = vshrl.u32 %v954, 16
      %v977 = vrot.slane %v975, 4
      %v978 = vshll.u32 %v954, 16
      %v980 = vrot.slane %v978, 5
      %v981 = vor.u32 %v977, %v980
      %v982 = vrot.slane %v981, 4
      %v984 = vshll.u32 %v955, 16
      %v986 = vrot.slane %v984, 5
      %v987 = vsel %vm366, %v982, %v986
      %v989 = vshrl.u32 %v956, 16
      %v991 = vrot.slane %v989, 4
      %v992 = vshll.u32 %v956, 16
      %v994 = vrot.slane %v992, 5
      %v995 = vor.u32 %v991, %v994
      %v996 = vrot.slane %v995, 4
      %v998 = vshll.u32 %v957, 16
      %v1000 = vrot.slane %v998, 5
      %v1001 = vsel %vm366, %v996, %v1000
      %v1003 = vshrl.u32 %v958, 16
      %v1005 = vrot.slane %v1003, 4
      %v1006 = vshll.u32 %v958, 16
      %v1008 = vrot.slane %v1006, 5
      %v1009 = vor.u32 %v1005, %v1008
      %v1010 = vrot.slane %v1009, 4
      %v1012 = vshll.u32 %v959, 16
      %v1014 = vrot.slane %v1012, 5
      %v1015 = vsel %vm366, %v1010, %v1014
      %s1016 = scalar_lea.vmem %s1, 32
      %v1017 = vld [vmem:[%s1016] sm:$0xf]
      %v1018 = vunpack.c.l.b16 %v973
      %v1019 = vunpack.c.l.b16 %v987
      %v1020 = vunpack.c.l.b16 %v1001
      %v1021 = vunpack.c.l.b16 %v1015
      %v1022 = vpack.c.b16 %v1019, %v1018
      %v1023 = vpack.c.b16 %v1021, %v1020
      %v1025 = vsel %vm228, %v1022, 0
      %v1028 = vsel %vm228, %v1023, 0
      %v1031 = vsel %vm235, %v1017, 0
      %1033 = vmatprep.subr.bf16.mxu0 0
      %1034 = vmatpush1.bf16.msra.mxu0 %v1031
      %1035 = vmatprep.subr.bf16.mxu0 0
      %1036 = vmatpush1.bf16.msra.mxu0 0
      %1037 = vmatprep.subr.bf16.mxu0 0
      %1038 = vmatpush1.bf16.msra.mxu0 0
      %1039 = vmatprep.subr.bf16.mxu0 0
      %1040 = vmatpush1.bf16.msra.mxu0 0
      %1041 = vmatprep.subr.bf16.mxu0 0
      %1042 = vmatpush1.bf16.msra.mxu0 0
      %1043 = vmatprep.subr.bf16.mxu0 0
      %1044 = vmatpush1.bf16.msra.mxu0 0
      %1045 = vmatprep.subr.bf16.mxu0 0
      %1046 = vmatpush1.bf16.msra.mxu0 0
      %1047 = vmatprep.subr.bf16.mxu0 0
      %1048 = vmatpush1.bf16.msra.mxu0 0
      %1049 = vmatprep.subr.bf16.mxu0 0
      %1050 = vmatpush1.bf16.msra.mxu0 0
      %1051 = vmatprep.subr.bf16.mxu0 0
      %1052 = vmatpush1.bf16.msra.mxu0 0
      %1053 = vmatprep.subr.bf16.mxu0 0
      %1054 = vmatpush1.bf16.msra.mxu0 0
      %1055 = vmatprep.subr.bf16.mxu0 0
      %1056 = vmatpush1.bf16.msra.mxu0 0
      %1057 = vmatprep.subr.bf16.mxu0 0
      %1058 = vmatpush1.bf16.msra.mxu0 0
      %1059 = vmatprep.subr.bf16.mxu0 0
      %1060 = vmatpush1.bf16.msra.mxu0 0
      %1061 = vmatprep.subr.bf16.mxu0 0
      %1062 = vmatpush1.bf16.msra.mxu0 0
      %1063 = vmatprep.subr.bf16.mxu0 0
      %1064 = vmatpush1.bf16.msra.mxu0 0
      %1065 = vmatprep.mubr.bf16.mxu0 0
      %1066 = vmatmul.mubr.bf16.gmra.mrb[0].mxu0 %v1025
      %v1067 = vpop.f32.mrb[0].mxu0
      %v1068 = vadd.f32 0.0, %v1067
      %v1069 = vpop.f32.mrb[0].mxu0
      %v1070 = vpop.f32.mrb[0].mxu0
      %v1071 = vadd.f32 0.0, %v1070
      %v1072 = vpop.f32.mrb[0].mxu0
      %1073 = vmatprep.mubr.bf16.mxu0 0
      %1074 = vmatmul.mubr.bf16.gmra.mrb[0].mxu0 %v1028
      %v1075 = vpop.f32.mrb[0].mxu0
      %v1076 = vadd.f32 0.0, %v1075
      %v1077 = vpop.f32.mrb[0].mxu0
      %v1078 = vpop.f32.mrb[0].mxu0
      %v1079 = vadd.f32 0.0, %v1078
      %v1080 = vpop.f32.mrb[0].mxu0
      %1081 = vdwg.mxu0
      %v1082 = vadd.f32 %v948, %v1068
      %v1083 = vadd.f32 %v949, %v1071
      %v1084 = vadd.f32 %v950, %v1076
      %v1085 = vadd.f32 %v951, %v1079
      %v1086 = vld [vmem:[%s2] sm:$0x1]
      %v1088 = vlaneseq
      %v1089 = vshrl.u32 %v1088, 7
      %v1090 = vsub.s32 0, %v1089
      %v1091 = vrot.slane %v1086, %v1090
      %v1093 = vadd.f32 %v1082, %v1091
      %v1094 = vadd.f32 %v1083, %v1091
      %v1095 = vadd.f32 %v1084, %v1091
      %v1096 = vadd.f32 %v1085, %v1091
      %vm1097 = vcmp.ge.f32.partialorder %v1093, 0.0
      %vm1098 = vcmp.ge.f32.partialorder %v1094, 0.0
      %vm1099 = vcmp.ge.f32.partialorder %v1095, 0.0
      %vm1100 = vcmp.ge.f32.partialorder %v1096, 0.0
      %v1101 = vmul.f32 %v1093, 0.2
      %v1102 = vmul.f32 %v1094, 0.2
      %v1103 = vmul.f32 %v1095, 0.2
      %v1104 = vmul.f32 %v1096, 0.2
      %v1105 = vsel %vm1097, %v1093, %v1101
      %v1106 = vsel %vm1098, %v1094, %v1102
      %v1107 = vsel %vm1099, %v1095, %v1103
      %v1108 = vsel %vm1100, %v1096, %v1104
      %1109 = vst [vmem:[%s197] sm:$0xff] %v1105
      %1110 = vst [vmem:[%s197 + $0x8] sm:$0xff] %v1106
      %1111 = vst [vmem:[%s197 + $0x10] sm:$0xff] %v1107
      %1112 = vst [vmem:[%s197 + $0x18] sm:$0xff] %v1108
      %s1113 = smul.u32 4, %s19
      %p1114 = scmp.lt.s32.totalorder %s18, 1
      %s1115 = scalar_select %p1114, %s18, 1
      %p1116 = scmp.lt.s32.totalorder %s1113, 7
      %s1117 = scalar_select %p1116, %s1113, 7
      %s1118 = smul.addr %s1115, 8
      %s1119 = sadd.s32 %s1117, %s1118
      %s1120 = smul.addr %s1119, 8
      %s1121 = scalar_lea.vmem %s3, %s1120
      // Predicated region
      $region33: #{down_block.1} parent=31 // pred_check
        %p1122 = pneg %p114
      $region34: #{down_block.1} parent=31 // pred_check_branch
        %1124 = sbr.rel (%p1122) target = $region36
      $region35: #{down_block.1} parent=31 // pred_region
        %s1125 = smul.u32 4, %s19
      $region36: #{down_block.1} parent=31 // pred_fallthru
        _
    $region32: #{down_block.1} parent=5 // pred_fallthru
      _
    %p1126 = scmp.le.s32.totalorder 2, %s9
    // Predicated region
    $region37: #{down_block.1} parent=5 // pred_check
      %p1127 = pneg %p1126
    $region38: #{down_block.1} parent=5 // pred_check_branch
      %1129 = sbr.rel (%p1127) target = $region40
    $region39: #{down_block.1} parent=5 // pred_region
      %s1130 = ssub.s32 %s9, 2
      // Predicated region
      $region41: #{down_block.1} parent=39 // pred_check
        %p1131 = pneg %p120
      $region42: #{down_block.1} parent=39 // pred_check_branch
        %1133 = sbr.rel (%p1131) target = $region44
      $region43: #{down_block.1} parent=39 // pred_region
        %s1134 = smul.u32 4, %s21
        %p1135 = scmp.lt.s32.totalorder %s20, 1
        %s1136 = scalar_select %p1135, %s20, 1
        %p1137 = scmp.lt.s32.totalorder %s1134, 7
        %s1138 = scalar_select %p1137, %s1134, 7
        %s1139 = smul.addr %s1136, 8
        %s1140 = sadd.s32 %s1138, %s1139
        %s1141 = smul.addr %s1140, 8
        %s1142 = scalar_lea.vmem %s3, %s1141
      $region44: #{down_block.1} parent=39 // pred_fallthru
        _
    $region40: #{down_block.1} parent=5 // pred_fallthru
      _
  $region6: #{down_block.1} parent=0 // loop_footer
    %s13 = sadd.s32 1, %s9
  $region7: #{down_block.1} parent=0 // loop_footer_branch
    %8 = sbr.rel target = $region3
  $region8: #{down_block.1} parent=0 // loop_exit
    _

</llo_original>
